<compile_context>
chip_gen: v5e
topology: v5e:2x2
jax: 0.10.0
libtpu: 0.0.40
codegen_flags: <defaults>
</compile_context>

<pallas_src>
import functools

import jax
import jax.numpy as jnp
from jax import lax
from jax.experimental import pallas as pl
from jax.experimental.pallas import tpu as pltpu


def _round_up(x, m):
    return (x + m - 1) // m * m


def _fit_tile(desired, total):
    """Largest multiple of 128 that is <= desired and divides `total` (total % 128 == 0)."""
    t = max(128, min(desired, total))
    t -= t % 128
    while total % t:
        t -= 128
    return t


# ---------------------------------------------------------------------------
# Pass 1: fused QKV projection, tiled over the sequence dimension.
# Weight stays in PyTorch nn.Linear layout (rows = output features); we
# contract on d_in with dot_general so the wrapper never materializes a
# transpose.  Output columns: [0,d) = q (already scaled), [d,2d) = k, [2d,3d) = v.
# ---------------------------------------------------------------------------
def _qkv_proj_kernel(x_ref, w_ref, qkv_ref):
    x = x_ref[...]                                              # (ts, d_in_p)
    qkv = lax.dot_general(x, w_ref[...], (((1,), (1,)), ((), ())),
                          preferred_element_type=jnp.float32)   # (ts, 3*d_out_p)
    qkv_ref[...] = qkv.astype(qkv_ref.dtype)


# ---------------------------------------------------------------------------
# Pass 2: flash-attention style scores + online softmax + context.
# grid = (num_q_tiles, num_kv_tiles); kv axis is the reduction ("arbitrary") axis.
# ---------------------------------------------------------------------------
def _flash_attn_kernel(q_ref, k_ref, v_ref, o_ref, m_sc, l_sc, acc_sc,
                       *, seq_len, tk, kv_resident, mask_keys):
    ki = pl.program_id(1)

    @pl.when(ki == 0)
    def _init():
        m_sc[...] = jnp.full_like(m_sc, -jnp.inf)
        l_sc[...] = jnp.zeros_like(l_sc)
        acc_sc[...] = jnp.zeros_like(acc_sc)

    if kv_resident:
        # K/V are fully resident in VMEM; slice the current kv tile in-kernel.
        start = pl.multiple_of(ki * tk, tk)
        k = k_ref[pl.ds(start, tk), :]
        v = v_ref[pl.ds(start, tk), :]
    else:
        k = k_ref[...]
        v = v_ref[...]

    # scores: contract the feature dims of q and k directly (no explicit k.T).
    s = lax.dot_general(q_ref[...], k, (((1,), (1,)), ((), ())),
                        preferred_element_type=jnp.float32)     # (tq, tk)

    if mask_keys:  # static: only emitted when the sequence dim was padded.
        # Padding (< 128 columns) only ever lands in the last kv tile and that
        # tile always starts with real keys, so m_new below stays finite.
        col = ki * tk + lax.broadcasted_iota(jnp.int32, s.shape, 1)
        s = jnp.where(col < seq_len, s, -1e30)

    m_prev = m_sc[...]
    m_new = jnp.maximum(m_prev, s.max(axis=-1, keepdims=True))
    alpha = jnp.exp(m_prev - m_new)
    p = jnp.exp(s - m_new)
    l_sc[...] = alpha * l_sc[...] + p.sum(axis=-1, keepdims=True)
    acc_sc[...] = alpha * acc_sc[...] + jnp.dot(
        p.astype(v.dtype), v, preferred_element_type=jnp.float32)
    m_sc[...] = m_new

    @pl.when(ki == pl.num_programs(1) - 1)
    def _finalize():
        inv_l = pl.reciprocal(l_sc[...], approx=True)           # EUP slot, ~free
        o_ref[...] = (acc_sc[...] * inv_l).astype(o_ref.dtype)


# ---------------------------------------------------------------------------
# Wrapper
# ---------------------------------------------------------------------------
def self_attention_v2(x, w_query, w_key, w_value, *,
                      tq=256, tk=256, ts=512,
                      intermediate_dtype=jnp.bfloat16,
                      kv_resident_budget_bytes=24 * 1024 * 1024,
                      vmem_cap_bytes=48 * 1024 * 1024):
    """Forward pass of SelfAttention_v2 (qkv_bias=False).

    x:                       (seq, d_in)
    w_query/w_key/w_value:   PyTorch nn.Linear layout, shape (d_out, d_in)
    """
    seq, d_in = x.shape
    d_out = w_query.shape[0]
    scale = 1.0 / (float(d_out) ** 0.5)
    x_dtype = x.dtype
    x_esize = jnp.dtype(x_dtype).itemsize
    i_dtype = jnp.dtype(intermediate_dtype)
    i_esize = i_dtype.itemsize

    # Pad feature dims to 128 lanes (full MXU width / unmasked, lane-dense
    # stores) and the sequence dim to a multiple of 128.  Zero padding keeps
    # the projections exact; padded keys are masked inside the attention
    # kernel; padded query rows are sliced away at the end.
    d_in_p = _round_up(d_in, 128)
    d_out_p = _round_up(d_out, 128)
    s_p = _round_up(seq, 128)

    ts = _fit_tile(ts, s_p)
    tq = _fit_tile(tq, s_p)
    tk = _fit_tile(tk, s_p)
    # v7x megacore: keep >= 2 q tiles whenever possible so the "parallel" q
    # axis can actually shard across both TensorCores.  (Pass 1 is HBM-bound
    # and HBM is shared per chip, so ts keeps its large value.)
    if s_p // tq < 2 and s_p >= 256:
        tq = _fit_tile(s_p // 2, s_p)

    x_p = jnp.pad(x, ((0, s_p - seq), (0, d_in_p - d_in)))

    def _pad_w(w):
        return jnp.pad(w, ((0, d_out_p - w.shape[0]), (0, d_in_p - w.shape[1])))

    # Fold the 1/sqrt(d_out) softmax scale into W_q (exact: scaling the weight
    # equals scaling q) and stack the three weights into one fused matrix.
    w_fused = jnp.concatenate(
        [_pad_w(w_query * scale), _pad_w(w_key), _pad_w(w_value)], axis=0
    ).astype(x_dtype)

    def _vmem_limit(need_bytes):
        return int(min(vmem_cap_bytes, max(need_bytes + (4 << 20), 16 << 20)))

    # ---- Pass 1: fused QKV projection ---------------------------------------
    n3 = 3 * d_out_p
    proj_need = (2 * ts * d_in_p * x_esize        # x tile (double-buffered)
                 + 2 * n3 * d_in_p * x_esize      # stationary weight (budget 2 bufs)
                 + 2 * ts * n3 * i_esize)         # output tile (double-buffered)
    proj_cost = pl.CostEstimate(
        flops=2 * s_p * d_in_p * n3,
        transcendentals=0,
        bytes_accessed=(s_p * d_in_p + n3 * d_in_p) * x_esize + s_p * n3 * i_esize,
    )
    qkv = pl.pallas_call(
        _qkv_proj_kernel,
        out_shape=jax.ShapeDtypeStruct((s_p, n3), i_dtype),
        grid_spec=pltpu.PrefetchScalarGridSpec(
            num_scalar_prefetch=0,
            grid=(s_p // ts,),
            in_specs=[
                pl.BlockSpec((ts, d_in_p), lambda i: (i, 0)),
                pl.BlockSpec((n3, d_in_p), lambda i: (0, 0)),   # stationary weight
            ],
            out_specs=pl.BlockSpec((ts, n3), lambda i: (i, 0)),
        ),
        compiler_params=pltpu.CompilerParams(
            dimension_semantics=("parallel",),
            vmem_limit_bytes=_vmem_limit(proj_need),
        ),
        cost_estimate=proj_cost,
    )(x_p, w_fused)

    # ---- Pass 2: flash attention --------------------------------------------
    nq, nk = s_p // tq, s_p // tk
    # Resident K/V: full-extent blocks with a constant index map -> each K/V
    # byte is DMA'd from HBM exactly once for the whole grid.  Budget assumes
    # (worst case) 2 pipeline buffers per input.
    kv_resident = (2 * 2 * s_p * d_out_p * i_esize) <= kv_resident_budget_bytes
    if kv_resident:
        k_spec = pl.BlockSpec((s_p, d_out_p), lambda qi, ki: (0, 1))
        v_spec = pl.BlockSpec((s_p, d_out_p), lambda qi, ki: (0, 2))
        kv_vmem = 2 * 2 * s_p * d_out_p * i_esize
        kv_hbm = 2 * s_p * d_out_p * i_esize
    else:
        k_spec = pl.BlockSpec((tk, d_out_p), lambda qi, ki: (ki, 1))
        v_spec = pl.BlockSpec((tk, d_out_p), lambda qi, ki: (ki, 2))
        kv_vmem = 2 * 2 * tk * d_out_p * i_esize
        kv_hbm = nq * 2 * s_p * d_out_p * i_esize       # re-streamed per q tile

    attn_need = (2 * tq * d_out_p * i_esize             # q tile
                 + kv_vmem
                 + 2 * tq * d_out_p * x_esize           # output tile
                 + tq * (d_out_p + 2) * 4)              # f32 scratch (m, l, acc)
    attn_cost = pl.CostEstimate(
        flops=4 * s_p * s_p * d_out_p,
        transcendentals=s_p * s_p + s_p * nk,
        bytes_accessed=s_p * d_out_p * i_esize + kv_hbm + s_p * d_out_p * x_esize,
    )
    out_p = pl.pallas_call(
        functools.partial(_flash_attn_kernel, seq_len=seq, tk=tk,
                          kv_resident=kv_resident, mask_keys=(s_p != seq)),
        out_shape=jax.ShapeDtypeStruct((s_p, d_out_p), x_dtype),
        grid_spec=pltpu.PrefetchScalarGridSpec(
            num_scalar_prefetch=0,
            grid=(nq, nk),
            in_specs=[
                pl.BlockSpec((tq, d_out_p), lambda qi, ki: (qi, 0)),  # q columns
                k_spec,                                               # k columns
                v_spec,                                               # v columns
            ],
            out_specs=pl.BlockSpec((tq, d_out_p), lambda qi, ki: (qi, 0)),
            scratch_shapes=[
                pltpu.VMEM((tq, 1), jnp.float32),        # running max m
                pltpu.VMEM((tq, 1), jnp.float32),        # running denom l
                pltpu.VMEM((tq, d_out_p), jnp.float32),  # running context acc
            ],
        ),
        compiler_params=pltpu.CompilerParams(
            dimension_semantics=("parallel", "arbitrary"),
            vmem_limit_bytes=_vmem_limit(attn_need),
        ),
        cost_estimate=attn_cost,
    )(qkv, qkv, qkv)

    return out_p[:seq, :d_out]


# ---------------------------------------------------------------------------
# Reference + test
# ---------------------------------------------------------------------------
def _reference(x, w_query, w_key, w_value):
    q = x @ w_query.T
    k = x @ w_key.T
    v = x @ w_value.T
    scores = q @ k.T
    weights = jax.nn.softmax(scores / (k.shape[-1] ** 0.5), axis=-1)
    return weights @ v


if __name__ == "__main__":
    key = jax.random.PRNGKey(0)

    # Test 1: small shapes consistent with the module's 2-D forward:
    # seq=8, d_in=32, d_out=16.
    seq, d_in, d_out = 8, 32, 16
    kx, kq, kk, kv = jax.random.split(key, 4)
    x = jax.random.normal(kx, (seq, d_in), dtype=jnp.float32)
    w_query = jax.random.normal(kq, (d_out, d_in), dtype=jnp.float32) * 0.1
    w_key = jax.random.normal(kk, (d_out, d_in), dtype=jnp.float32) * 0.1
    w_value = jax.random.normal(kv, (d_out, d_in), dtype=jnp.float32) * 0.1

    out = self_attention_v2(x, w_query, w_key, w_value)
    jax.block_until_ready(out)
    ref = _reference(x, w_query, w_key, w_value)
    assert out.shape == (seq, d_out)
    # bf16 intermediates + approx reciprocal -> looser tolerance than pure f32.
    err = float(jnp.max(jnp.abs(out - ref)))
    assert jnp.allclose(out, ref, atol=3e-2, rtol=3e-2), err

    # Test 2: exercises seq padding/masking, a multi-tile (3x3) attention grid,
    # and the resident-K/V path.
    seq2, d_in2, d_out2 = 300, 96, 64
    kx2, kq2, kk2, kv2 = jax.random.split(jax.random.PRNGKey(1), 4)
    x2 = jax.random.normal(kx2, (seq2, d_in2), dtype=jnp.float32)
    wq2 = jax.random.normal(kq2, (d_out2, d_in2), dtype=jnp.float32) * 0.1
    wk2 = jax.random.normal(kk2, (d_out2, d_in2), dtype=jnp.float32) * 0.1
    wv2 = jax.random.normal(kv2, (d_out2, d_in2), dtype=jnp.float32) * 0.1
    out2 = self_attention_v2(x2, wq2, wk2, wv2)
    jax.block_until_ready(out2)
    ref2 = _reference(x2, wq2, wk2, wv2)
    assert out2.shape == (seq2, d_out2)
    err2 = float(jnp.max(jnp.abs(out2 - ref2)))
    assert jnp.allclose(out2, ref2, atol=3e-2, rtol=3e-2), err2

    print("KERNEL_OK")
</pallas_src>

<mosaic_0001>
module attributes {stable_mosaic.version = 11 : i64} {
  func.func @_qkv_proj_kernel(%arg0: i32, %arg1: memref<128x128xf32, #tpu.memory_space<vmem>>, %arg2: memref<384x128xf32, #tpu.memory_space<vmem>>, %arg3: memref<128x384xbf16, #tpu.memory_space<vmem>>) attributes {dimension_semantics = [#tpu.dimension_semantics<parallel>], iteration_bounds = array<i64: 1>, scalar_prefetch = 0 : i64, scratch_operands = 0 : i64, tpu.core_type = #tpu.core_type<tc>, window_params = [{transform_indices = @transform_0, window_bounds = array<i64: 128, 128>}, {pipeline_mode = #tpu.pipeline_mode<synchronous>, transform_indices = @transform_1, window_bounds = array<i64: 384, 128>}, {transform_indices = @transform_2, window_bounds = array<i64: 128, 384>}]} {
    %c0 = arith.constant 0 : index
    %c0_0 = arith.constant 0 : index
    %0 = vector.load %arg1[%c0, %c0_0] : memref<128x128xf32, #tpu.memory_space<vmem>>, vector<128x128xf32>
    %c0_1 = arith.constant 0 : index
    %c0_2 = arith.constant 0 : index
    %1 = vector.load %arg2[%c0_1, %c0_2] : memref<384x128xf32, #tpu.memory_space<vmem>>, vector<384x128xf32>
    %cst = arith.constant dense<0.000000e+00> : vector<128x384xf32>
    %2 = tpu.matmul %0, %1, %cst {dimension_numbers = #tpu.dot_dimension_numbers<[1], [1], [0], [0], [0, 0, 1, 0], [], []>} : vector<128x128xf32>, vector<384x128xf32>, vector<128x384xf32> -> vector<128x384xf32>
    %3 = arith.truncf %2 : vector<128x384xf32> to vector<128x384xbf16>
    %c0_3 = arith.constant 0 : index
    %c0_4 = arith.constant 0 : index
    %4 = vector.load %arg3[%c0_3, %c0_4] : memref<128x384xbf16, #tpu.memory_space<vmem>>, vector<128x384xbf16>
    tpu.vector_store %arg3[%c0_3, %c0_4], %3 {strides = array<i32>} : memref<128x384xbf16, #tpu.memory_space<vmem>>, vector<128x384xbf16>,
    return
  }
  func.func @transform_0(%arg0: i32) -> (i32, i32) {
    %c0_i32 = arith.constant 0 : i32
    %c0_i32_0 = arith.constant 0 : i32
    return %arg0, %c0_i32 : i32, i32
  }
  func.func @transform_1(%arg0: i32) -> (i32, i32) {
    %c0_i32 = arith.constant 0 : i32
    %c0_i32_0 = arith.constant 0 : i32
    %c0_i32_1 = arith.constant 0 : i32
    return %c0_i32, %c0_i32_0 : i32, i32
  }
  func.func @transform_2(%arg0: i32) -> (i32, i32) {
    %c0_i32 = arith.constant 0 : i32
    %c0_i32_0 = arith.constant 0 : i32
    return %arg0, %c0_i32 : i32, i32
  }
}

</mosaic_0001>

<llo_original>
// kernel: tpu_custom_call.1
$region0: #{tpu_custom_call.1}
  #allocation0 [shape = 'u32[]', space=smem, size = 0x4, offset = 0x4, fixed_abs, tag = 'smem constant byte address 0x4 - core index']
  #allocation1 [shape = 'u32[72,128]{1,0:T(1,128)}', space=vmem, size = 0x9000, scoped, tag = 'internal scratch']
  %s0 = inlined_call_operand.hbm [shape: f32[128,128], index: 0, kind: input, shape index: {}]
  %s1 = inlined_call_operand.hbm [shape: f32[384,128], index: 1, kind: input, shape index: {}]
  %s2 = inlined_call_operand.hbm [shape: bf16[128,384], index: 2, kind: output, shape index: {}]
  %s3 = sld [smem:[#allocation0]]
  $region26: #{tpu_custom_call.1} parent=0
    _
  %s5 = ssub.s32 1, %s3
  %s6 = scalar_select 0, %s5, %s3
  $region1: #{tpu_custom_call.1} parent=0
    #allocation2 [shape = 'u8[65536]{0}', space=vmem, size = 0x10000, scoped, tag = 'input window, operand 0, single buffered']
    #allocation3 [shape = 's32[1]{0}', space=sflag, size = 0x4, scoped, tag = 'scoped memory for tpu_custom_call.1']
    #allocation4 [shape = 's32[1]{0}', space=sflag, size = 0x4, scoped, tag = 'scoped memory for tpu_custom_call.1']
    #allocation5 [shape = 'u8[196608]{0}', space=vmem, size = 0x30000, scoped, tag = 'input window, operand 1, single buffered']
    #allocation6 [shape = 's32[1]{0}', space=sflag, size = 0x4, scoped, tag = 'scoped memory for tpu_custom_call.1']
    #allocation7 [shape = 'u8[98304]{0}', space=vmem, size = 0x18000, scoped, tag = 'output window, operand 0, single buffered']
    %7 = vsyncpa [#allocation3], 0
    %8 = vsyncpa [#allocation6], 0
    %9 = vsyncpa [#allocation4], 0
    // Predicated region
    $region2: #{tpu_custom_call.1} parent=1 // pred_check
      _
    $region3: #{tpu_custom_call.1} parent=1 // pred_check_branch
      %11 = sbr.rel (0) target = $region5
    $region4: #{tpu_custom_call.1} parent=1 // pred_region
      %13 = vsyncadd [#allocation3], 0
      %s14 = sshll.u32 %s0, 4
      %s15 = int_to_ptr.hbm [resolvable:$true] %s14
      %s16 = sshll.u32 [#allocation2], 4
      %s17 = int_to_ptr.vmem [resolvable:$true] %s16
      %22 = dma.hbm_to_vmem [thread:$0]  %s15, 2048, %s17, [#allocation3], 128, 128, 8
    $region5: #{tpu_custom_call.1} parent=1 // pred_fallthru
      _
    // Predicated region
    $region6: #{tpu_custom_call.1} parent=1 // pred_check
      _
    $region7: #{tpu_custom_call.1} parent=1 // pred_check_branch
      %24 = sbr.rel (0) target = $region9
    $region8: #{tpu_custom_call.1} parent=1 // pred_region
      %26 = vsyncadd [#allocation6], 0
      %s27 = sshll.u32 %s1, 4
      %s28 = int_to_ptr.hbm [resolvable:$true] %s27
      %s29 = sshll.u32 [#allocation5], 4
      %s30 = int_to_ptr.vmem [resolvable:$true] %s29
      %35 = dma.hbm_to_vmem [thread:$0]  %s28, 6144, %s30, [#allocation6], 128, 128, 8
    $region9: #{tpu_custom_call.1} parent=1 // pred_fallthru
      _
    // Predicated region
    $region10: #{tpu_custom_call.1} parent=1 // pred_check
      _
    $region11: #{tpu_custom_call.1} parent=1 // pred_check_branch
      %37 = sbr.rel (0) target = $region13
    $region12: #{tpu_custom_call.1} parent=1 // pred_region
      %39 = dma.done [#allocation3], 2048
    $region13: #{tpu_custom_call.1} parent=1 // pred_fallthru
      _
    // Predicated region
    $region14: #{tpu_custom_call.1} parent=1 // pred_check
      _
    $region15: #{tpu_custom_call.1} parent=1 // pred_check_branch
      %41 = sbr.rel (0) target = $region17
    $region16: #{tpu_custom_call.1} parent=1 // pred_region
      %43 = dma.done [#allocation6], 6144
    $region17: #{tpu_custom_call.1} parent=1 // pred_fallthru
      _
    %v44 = vld [vmem:[#allocation2] sm:$0xff]
    %v45 = vld [vmem:[#allocation2 + $0x8] sm:$0xff]
    %v46 = vld [vmem:[#allocation2 + $0x10] sm:$0xff]
    %v47 = vld [vmem:[#allocation2 + $0x18] sm:$0xff]
    %v48 = vld [vmem:[#allocation2 + $0x20] sm:$0xff]
    %v49 = vld [vmem:[#allocation2 + $0x28] sm:$0xff]
    %v50 = vld [vmem:[#allocation2 + $0x30] sm:$0xff]
    %v51 = vld [vmem:[#allocation2 + $0x38] sm:$0xff]
    %v52 = vld [vmem:[#allocation2 + $0x40] sm:$0xff]
    %v53 = vld [vmem:[#allocation2 + $0x48] sm:$0xff]
    %v54 = vld [vmem:[#allocation2 + $0x50] sm:$0xff]
    %v55 = vld [vmem:[#allocation2 + $0x58] sm:$0xff]
    %v56 = vld [vmem:[#allocation2 + $0x60] sm:$0xff]
    %v57 = vld [vmem:[#allocation2 + $0x68] sm:$0xff]
    %v58 = vld [vmem:[#allocation2 + $0x70] sm:$0xff]
    %v59 = vld [vmem:[#allocation2 + $0x78] sm:$0xff]
    %v60 = vld [vmem:[#allocation5] sm:$0xff]
    %v61 = vld [vmem:[#allocation5 + $0x8] sm:$0xff]
    %v62 = vld [vmem:[#allocation5 + $0x10] sm:$0xff]
    %v63 = vld [vmem:[#allocation5 + $0x18] sm:$0xff]
    %v64 = vld [vmem:[#allocation5 + $0x20] sm:$0xff]
    %v65 = vld [vmem:[#allocation5 + $0x28] sm:$0xff]
    %v66 = vld [vmem:[#allocation5 + $0x30] sm:$0xff]
    %v67 = vld [vmem:[#allocation5 + $0x38] sm:$0xff]
    %v68 = vld [vmem:[#allocation5 + $0x40] sm:$0xff]
    %v69 = vld [vmem:[#allocation5 + $0x48] sm:$0xff]
    %v70 = vld [vmem:[#allocation5 + $0x50] sm:$0xff]
    %v71 = vld [vmem:[#allocation5 + $0x58] sm:$0xff]
    %v72 = vld [vmem:[#allocation5 + $0x60] sm:$0xff]
    %v73 = vld [vmem:[#allocation5 + $0x68] sm:$0xff]
    %v74 = vld [vmem:[#allocation5 + $0x70] sm:$0xff]
    %v75 = vld [vmem:[#allocation5 + $0x78] sm:$0xff]
    %v76 = vld [vmem:[#allocation5 + $0x80] sm:$0xff]
    %v77 = vld [vmem:[#allocation5 + $0x88] sm:$0xff]
    %v78 = vld [vmem:[#allocation5 + $0x90] sm:$0xff]
    %v79 = vld [vmem:[#allocation5 + $0x98] sm:$0xff]
    %v80 = vld [vmem:[#allocation5 + $0xa0] sm:$0xff]
    %v81 = vld [vmem:[#allocation5 + $0xa8] sm:$0xff]
    %v82 = vld [vmem:[#allocation5 + $0xb0] sm:$0xff]
    %v83 = vld [vmem:[#allocation5 + $0xb8] sm:$0xff]
    %v84 = vld [vmem:[#allocation5 + $0xc0] sm:$0xff]
    %v85 = vld [vmem:[#allocation5 + $0xc8] sm:$0xff]
    %v86 = vld [vmem:[#allocation5 + $0xd0] sm:$0xff]
    %v87 = vld [vmem:[#allocation5 + $0xd8] sm:$0xff]
    %v88 = vld [vmem:[#allocation5 + $0xe0] sm:$0xff]
    %v89 = vld [vmem:[#allocation5 + $0xe8] sm:$0xff]
    %v90 = vld [vmem:[#allocation5 + $0xf0] sm:$0xff]
    %v91 = vld [vmem:[#allocation5 + $0xf8] sm:$0xff]
    %v92 = vld [vmem:[#allocation5 + $0x100] sm:$0xff]
    %v93 = vld [vmem:[#allocation5 + $0x108] sm:$0xff]
    %v94 = vld [vmem:[#allocation5 + $0x110] sm:$0xff]
    %v95 = vld [vmem:[#allocation5 + $0x118] sm:$0xff]
    %v96 = vld [vmem:[#allocation5 + $0x120] sm:$0xff]
    %v97 = vld [vmem:[#allocation5 + $0x128] sm:$0xff]
    %v98 = vld [vmem:[#allocation5 + $0x130] sm:$0xff]
    %v99 = vld [vmem:[#allocation5 + $0x138] sm:$0xff]
    %v100 = vld [vmem:[#allocation5 + $0x140] sm:$0xff]
    %v101 = vld [vmem:[#allocation5 + $0x148] sm:$0xff]
    %v102 = vld [vmem:[#allocation5 + $0x150] sm:$0xff]
    %v103 = vld [vmem:[#allocation5 + $0x158] sm:$0xff]
    %v104 = vld [vmem:[#allocation5 + $0x160] sm:$0xff]
    %v105 = vld [vmem:[#allocation5 + $0x168] sm:$0xff]
    %v106 = vld [vmem:[#allocation5 + $0x170] sm:$0xff]
    %v107 = vld [vmem:[#allocation5 + $0x178] sm:$0xff]
    %108 = vmatpush.xpose.msra.mxu0 %v75
    %109 = vmatpush.xpose.msra.mxu0 %v74
    %110 = vmatpush.xpose.msra.mxu0 %v73
    %111 = vmatpush.xpose.msra.mxu0 %v72
    %112 = vmatpush.xpose.msra.mxu0 %v71
    %113 = vmatpush.xpose.msra.mxu0 %v70
    %114 = vmatpush.xpose.msra.mxu0 %v69
    %115 = vmatpush.xpose.msra.mxu0 %v68
    %116 = vmatpush.xpose.msra.mxu0 %v67
    %117 = vmatpush.xpose.msra.mxu0 %v66
    %118 = vmatpush.xpose.msra.mxu0 %v65
    %119 = vmatpush.xpose.msra.mxu0 %v64
    %120 = vmatpush.xpose.msra.mxu0 %v63
    %121 = vmatpush.xpose.msra.mxu0 %v62
    %122 = vmatpush.xpose.msra.mxu0 %v61
    %123 = vmatpush.xpose.msra.mxu0 %v60
    %124 = vmatmul.f32.gmra.mxu0 %v44
    %v125 = vpop.f32.mrf.mxu0
    %v126 = vadd.f32 0.0, %v125
    %127 = vmatmul.f32.gmra.mxu0 %v45
    %v128 = vpop.f32.mrf.mxu0
    %v129 = vadd.f32 0.0, %v128
    %130 = vmatmul.f32.gmra.mxu0 %v46
    %v131 = vpop.f32.mrf.mxu0
    %v132 = vadd.f32 0.0, %v131
    %133 = vmatmul.f32.gmra.mxu0 %v47
    %v134 = vpop.f32.mrf.mxu0
    %v135 = vadd.f32 0.0, %v134
    %136 = vmatmul.f32.gmra.mxu0 %v48
    %v137 = vpop.f32.mrf.mxu0
    %v138 = vadd.f32 0.0, %v137
    %139 = vmatmul.f32.gmra.mxu0 %v49
    %v140 = vpop.f32.mrf.mxu0
    %v141 = vadd.f32 0.0, %v140
    %142 = vmatmul.f32.gmra.mxu0 %v50
    %v143 = vpop.f32.mrf.mxu0
    %v144 = vadd.f32 0.0, %v143
    %145 = vmatmul.f32.gmra.mxu0 %v51
    %v146 = vpop.f32.mrf.mxu0
    %v147 = vadd.f32 0.0, %v146
    %148 = vmatmul.f32.gmra.mxu0 %v52
    %v149 = vpop.f32.mrf.mxu0
    %v150 = vadd.f32 0.0, %v149
    %151 = vmatmul.f32.gmra.mxu0 %v53
    %v152 = vpop.f32.mrf.mxu0
    %v153 = vadd.f32 0.0, %v152
    %154 = vmatmul.f32.gmra.mxu0 %v54
    %v155 = vpop.f32.mrf.mxu0
    %v156 = vadd.f32 0.0, %v155
    %157 = vmatmul.f32.gmra.mxu0 %v55
    %v158 = vpop.f32.mrf.mxu0
    %v159 = vadd.f32 0.0, %v158
    %160 = vmatmul.f32.gmra.mxu0 %v56
    %v161 = vpop.f32.mrf.mxu0
    %v162 = vadd.f32 0.0, %v161
    %163 = vmatmul.f32.gmra.mxu0 %v57
    %v164 = vpop.f32.mrf.mxu0
    %v165 = vadd.f32 0.0, %v164
    %166 = vmatmul.f32.gmra.mxu0 %v58
    %v167 = vpop.f32.mrf.mxu0
    %v168 = vadd.f32 0.0, %v167
    %169 = vmatmul.f32.gmra.mxu0 %v59
    %v170 = vpop.f32.mrf.mxu0
    %v171 = vadd.f32 0.0, %v170
    %172 = vdwg.mxu0
    %173 = vmatpush.xpose.msra.mxu0 %v91
    %174 = vmatpush.xpose.msra.mxu0 %v90
    %175 = vmatpush.xpose.msra.mxu0 %v89
    %176 = vmatpush.xpose.msra.mxu0 %v88
    %177 = vmatpush.xpose.msra.mxu0 %v87
    %178 = vmatpush.xpose.msra.mxu0 %v86
    %179 = vmatpush.xpose.msra.mxu0 %v85
    %180 = vmatpush.xpose.msra.mxu0 %v84
    %181 = vmatpush.xpose.msra.mxu0 %v83
    %182 = vmatpush.xpose.msra.mxu0 %v82
    %183 = vmatpush.xpose.msra.mxu0 %v81
    %184 = vmatpush.xpose.msra.mxu0 %v80
    %185 = vmatpush.xpose.msra.mxu0 %v79
    %186 = vmatpush.xpose.msra.mxu0 %v78
    %187 = vmatpush.xpose.msra.mxu0 %v77
    %188 = vmatpush.xpose.msra.mxu0 %v76
    %189 = vmatmul.f32.gmra.mxu0 %v44
    %v190 = vpop.f32.mrf.mxu0
    %v191 = vadd.f32 0.0, %v190
    %192 = vmatmul.f32.gmra.mxu0 %v45
    %v193 = vpop.f32.mrf.mxu0
    %v194 = vadd.f32 0.0, %v193
    %195 = vmatmul.f32.gmra.mxu0 %v46
    %v196 = vpop.f32.mrf.mxu0
    %v197 = vadd.f32 0.0, %v196
    %198 = vmatmul.f32.gmra.mxu0 %v47
    %v199 = vpop.f32.mrf.mxu0
    %v200 = vadd.f32 0.0, %v199
    %201 = vmatmul.f32.gmra.mxu0 %v48
    %v202 = vpop.f32.mrf.mxu0
    %v203 = vadd.f32 0.0, %v202
    %204 = vmatmul.f32.gmra.mxu0 %v49
    %v205 = vpop.f32.mrf.mxu0
    %v206 = vadd.f32 0.0, %v205
    %207 = vmatmul.f32.gmra.mxu0 %v50
    %v208 = vpop.f32.mrf.mxu0
    %v209 = vadd.f32 0.0, %v208
    %210 = vmatmul.f32.gmra.mxu0 %v51
    %v211 = vpop.f32.mrf.mxu0
    %v212 = vadd.f32 0.0, %v211
    %213 = vmatmul.f32.gmra.mxu0 %v52
    %v214 = vpop.f32.mrf.mxu0
    %v215 = vadd.f32 0.0, %v214
    %216 = vmatmul.f32.gmra.mxu0 %v53
    %v217 = vpop.f32.mrf.mxu0
    %v218 = vadd.f32 0.0, %v217
    %219 = vmatmul.f32.gmra.mxu0 %v54
    %v220 = vpop.f32.mrf.mxu0
    %v221 = vadd.f32 0.0, %v220
    %222 = vmatmul.f32.gmra.mxu0 %v55
    %v223 = vpop.f32.mrf.mxu0
    %v224 = vadd.f32 0.0, %v223
    %225 = vmatmul.f32.gmra.mxu0 %v56
    %v226 = vpop.f32.mrf.mxu0
    %v227 = vadd.f32 0.0, %v226
    %228 = vmatmul.f32.gmra.mxu0 %v57
    %v229 = vpop.f32.mrf.mxu0
    %v230 = vadd.f32 0.0, %v229
    %231 = vmatmul.f32.gmra.mxu0 %v58
    %v232 = vpop.f32.mrf.mxu0
    %v233 = vadd.f32 0.0, %v232
    %234 = vmatmul.f32.gmra.mxu0 %v59
    %v235 = vpop.f32.mrf.mxu0
    %v236 = vadd.f32 0.0, %v235
    %237 = vdwg.mxu0
    %238 = vmatpush.xpose.msra.mxu0 %v107
    %239 = vmatpush.xpose.msra.mxu0 %v106
    %240 = vmatpush.xpose.msra.mxu0 %v105
    %241 = vmatpush.xpose.msra.mxu0 %v104
    %242 = vmatpush.xpose.msra.mxu0 %v103
    %243 = vmatpush.xpose.msra.mxu0 %v102
    %244 = vmatpush.xpose.msra.mxu0 %v101
    %245 = vmatpush.xpose.msra.mxu0 %v100
    %246 = vmatpush.xpose.msra.mxu0 %v99
    %247 = vmatpush.xpose.msra.mxu0 %v98
    %248 = vmatpush.xpose.msra.mxu0 %v97
    %249 = vmatpush.xpose.msra.mxu0 %v96
    %250 = vmatpush.xpose.msra.mxu0 %v95
    %251 = vmatpush.xpose.msra.mxu0 %v94
    %252 = vmatpush.xpose.msra.mxu0 %v93
    %253 = vmatpush.xpose.msra.mxu0 %v92
    %254 = vmatmul.f32.gmra.mxu0 %v44
    %v255 = vpop.f32.mrf.mxu0
    %v256 = vadd.f32 0.0, %v255
    %257 = vmatmul.f32.gmra.mxu0 %v45
    %v258 = vpop.f32.mrf.mxu0
    %v259 = vadd.f32 0.0, %v258
    %260 = vmatmul.f32.gmra.mxu0 %v46
    %v261 = vpop.f32.mrf.mxu0
    %v262 = vadd.f32 0.0, %v261
    %263 = vmatmul.f32.gmra.mxu0 %v47
    %v264 = vpop.f32.mrf.mxu0
    %v265 = vadd.f32 0.0, %v264
    %266 = vmatmul.f32.gmra.mxu0 %v48
    %v267 = vpop.f32.mrf.mxu0
    %v268 = vadd.f32 0.0, %v267
    %269 = vmatmul.f32.gmra.mxu0 %v49
    %v270 = vpop.f32.mrf.mxu0
    %v271 = vadd.f32 0.0, %v270
    %272 = vmatmul.f32.gmra.mxu0 %v50
    %v273 = vpop.f32.mrf.mxu0
    %v274 = vadd.f32 0.0, %v273
    %275 = vmatmul.f32.gmra.mxu0 %v51
    %v276 = vpop.f32.mrf.mxu0
    %v277 = vadd.f32 0.0, %v276
    %278 = vmatmul.f32.gmra.mxu0 %v52
    %v279 = vpop.f32.mrf.mxu0
    %v280 = vadd.f32 0.0, %v279
    %281 = vmatmul.f32.gmra.mxu0 %v53
    %v282 = vpop.f32.mrf.mxu0
    %v283 = vadd.f32 0.0, %v282
    %284 = vmatmul.f32.gmra.mxu0 %v54
    %v285 = vpop.f32.mrf.mxu0
    %v286 = vadd.f32 0.0, %v285
    %287 = vmatmul.f32.gmra.mxu0 %v55
    %v288 = vpop.f32.mrf.mxu0
    %v289 = vadd.f32 0.0, %v288
    %290 = vmatmul.f32.gmra.mxu0 %v56
    %v291 = vpop.f32.mrf.mxu0
    %v292 = vadd.f32 0.0, %v291
    %293 = vmatmul.f32.gmra.mxu0 %v57
    %v294 = vpop.f32.mrf.mxu0
    %v295 = vadd.f32 0.0, %v294
    %296 = vmatmul.f32.gmra.mxu0 %v58
    %v297 = vpop.f32.mrf.mxu0
    %v298 = vadd.f32 0.0, %v297
    %299 = vmatmul.f32.gmra.mxu0 %v59
    %v300 = vpop.f32.mrf.mxu0
    %v301 = vadd.f32 0.0, %v300
    %302 = vdwg.mxu0
    %v303 = vpack.c.bf16 %v191, %v126
    %v304 = vpack.c.bf16 %v256, %v256
    %v305 = vpack.c.bf16 %v194, %v129
    %v306 = vpack.c.bf16 %v259, %v259
    %v307 = vpack.c.bf16 %v197, %v132
    %v308 = vpack.c.bf16 %v262, %v262
    %v309 = vpack.c.bf16 %v200, %v135
    %v310 = vpack.c.bf16 %v265, %v265
    %v311 = vpack.c.bf16 %v203, %v138
    %v312 = vpack.c.bf16 %v268, %v268
    %v313 = vpack.c.bf16 %v206, %v141
    %v314 = vpack.c.bf16 %v271, %v271
    %v315 = vpack.c.bf16 %v209, %v144
    %v316 = vpack.c.bf16 %v274, %v274
    %v317 = vpack.c.bf16 %v212, %v147
    %v318 = vpack.c.bf16 %v277, %v277
    %v319 = vpack.c.bf16 %v215, %v150
    %v320 = vpack.c.bf16 %v280, %v280
    %v321 = vpack.c.bf16 %v218, %v153
    %v322 = vpack.c.bf16 %v283, %v283
    %v323 = vpack.c.bf16 %v221, %v156
    %v324 = vpack.c.bf16 %v286, %v286
    %v325 = vpack.c.bf16 %v224, %v159
    %v326 = vpack.c.bf16 %v289, %v289
    %v327 = vpack.c.bf16 %v227, %v162
    %v328 = vpack.c.bf16 %v292, %v292
    %v329 = vpack.c.bf16 %v230, %v165
    %v330 = vpack.c.bf16 %v295, %v295
    %v331 = vpack.c.bf16 %v233, %v168
    %v332 = vpack.c.bf16 %v298, %v298
    %v333 = vpack.c.bf16 %v236, %v171
    %v334 = vpack.c.bf16 %v301, %v301
    %335 = vst [vmem:[#allocation7] sm:$0xff] %v303
    %336 = vst [vmem:[#allocation7 + $0x8] sm:$0xf] %v304
    %337 = vst [vmem:[#allocation7 + $0xc] sm:$0xff] %v305
    %338 = vst [vmem:[#allocation7 + $0x14] sm:$0xf] %v306
    %339 = vst [vmem:[#allocation7 + $0x18] sm:$0xff] %v307
    %340 = vst [vmem:[#allocation7 + $0x20] sm:$0xf] %v308
    %341 = vst [vmem:[#allocation7 + $0x24] sm:$0xff] %v309
    %342 = vst [vmem:[#allocation7 + $0x2c] sm:$0xf] %v310
    %343 = vst [vmem:[#allocation7 + $0x30] sm:$0xff] %v311
    %344 = vst [vmem:[#allocation7 + $0x38] sm:$0xf] %v312
    %345 = vst [vmem:[#allocation7 + $0x3c] sm:$0xff] %v313
    %346 = vst [vmem:[#allocation7 + $0x44] sm:$0xf] %v314
    %347 = vst [vmem:[#allocation7 + $0x48] sm:$0xff] %v315
    %348 = vst [vmem:[#allocation7 + $0x50] sm:$0xf] %v316
    %349 = vst [vmem:[#allocation7 + $0x54] sm:$0xff] %v317
    %350 = vst [vmem:[#allocation7 + $0x5c] sm:$0xf] %v318
    %351 = vst [vmem:[#allocation7 + $0x60] sm:$0xff] %v319
    %352 = vst [vmem:[#allocation7 + $0x68] sm:$0xf] %v320
    %353 = vst [vmem:[#allocation7 + $0x6c] sm:$0xff] %v321
    %354 = vst [vmem:[#allocation7 + $0x74] sm:$0xf] %v322
    %355 = vst [vmem:[#allocation7 + $0x78] sm:$0xff] %v323
    %356 = vst [vmem:[#allocation7 + $0x80] sm:$0xf] %v324
    %357 = vst [vmem:[#allocation7 + $0x84] sm:$0xff] %v325
    %358 = vst [vmem:[#allocation7 + $0x8c] sm:$0xf] %v326
    %359 = vst [vmem:[#allocation7 + $0x90] sm:$0xff] %v327
    %360 = vst [vmem:[#allocation7 + $0x98] sm:$0xf] %v328
    %361 = vst [vmem:[#allocation7 + $0x9c] sm:$0xff] %v329
    %362 = vst [vmem:[#allocation7 + $0xa4] sm:$0xf] %v330
    %363 = vst [vmem:[#allocation7 + $0xa8] sm:$0xff] %v331
    %364 = vst [vmem:[#allocation7 + $0xb0] sm:$0xf] %v332
    %365 = vst [vmem:[#allocation7 + $0xb4] sm:$0xff] %v333
    %366 = vst [vmem:[#allocation7 + $0xbc] sm:$0xf] %v334
    // Predicated region
    $region18: #{tpu_custom_call.1} parent=1 // pred_check
      _
    $region19: #{tpu_custom_call.1} parent=1 // pred_check_branch
      %368 = sbr.rel (0) target = $region21
    $region20: #{tpu_custom_call.1} parent=1 // pred_region
      %370 = vsyncadd [#allocation4], 0
      %s371 = sshll.u32 [#allocation7], 4
      %s372 = int_to_ptr.vmem [resolvable:$true] %s371
      %s373 = sshll.u32 %s2, 4
      %s374 = int_to_ptr.hbm [resolvable:$true] %s373
      %379 = dma.vmem_to_hbm [thread:$0]  %s372, 3072, %s374, [#allocation4], 192, 192, 12
    $region21: #{tpu_custom_call.1} parent=1 // pred_fallthru
      _
    // Predicated region
    $region22: #{tpu_custom_call.1} parent=1 // pred_check
      _
    $region23: #{tpu_custom_call.1} parent=1 // pred_check_branch
      %381 = sbr.rel (0) target = $region25
    $region24: #{tpu_custom_call.1} parent=1 // pred_region
      %383 = dma.done [#allocation4], 3072
    $region25: #{tpu_custom_call.1} parent=1 // pred_fallthru
      _
    %384 = vsyncpa [#allocation3], 1
    %385 = vsyncpa [#allocation6], 1
    %386 = vsyncpa [#allocation4], 1

</llo_original>
